<compile_context>
chip_gen: v5e
topology: v5e:2x2
jax: 0.10.0
libtpu: 0.0.40
codegen_flags: <defaults>
</compile_context>

<pallas_src>
import functools

import jax
import jax.numpy as jnp
from jax.experimental import pallas as pl
from jax.experimental.pallas import tpu as pltpu


def _label_smoothing_kernel(logits_ref, target_ref, out_ref, *,
                            num_classes, smoothing_coef):
    confidence = 1.0 - smoothing_coef
    smooth_val = smoothing_coef / (num_classes - 1)

    x = logits_ref[...].astype(jnp.float32)              # (T, C) f32
    tgt = target_ref[...]                                 # (T, 1) int32
    t, c = x.shape                                         # c == num_classes

    # Numerically stable log-softmax pieces; all reductions keepdims so every
    # intermediate stays in native (sublane, lane) layout.
    m = jnp.max(x, axis=-1, keepdims=True)                 # (T, 1)
    shifted = x - m                                        # (T, C)
    lse = jnp.log(jnp.sum(jnp.exp(shifted), axis=-1, keepdims=True))  # (T, 1)

    # Algebraic form of sum_over_classes(-true_dist * logp):
    #   sum(logp)    = sum(shifted) - C * lse
    #   logp[target] = shifted[target] - lse
    sum_shifted = jnp.sum(shifted, axis=-1, keepdims=True)             # (T, 1)
    class_ids = jax.lax.broadcasted_iota(jnp.int32, (t, c), dimension=1)
    shifted_at_tgt = jnp.sum(jnp.where(class_ids == tgt, shifted, 0.0),
                             axis=-1, keepdims=True)                   # (T, 1)

    sum_logp = sum_shifted - jnp.float32(c) * lse
    logp_at_tgt = shifted_at_tgt - lse
    per_row = -(jnp.float32(smooth_val) * sum_logp
                + jnp.float32(confidence - smooth_val) * logp_at_tgt)   # (T, 1)

    out_ref[...] = per_row


def _choose_tile_n(n, c, itemsize, buffer_budget_bytes=2 << 20):
    """Rows per block so 2 input pipeline buffers + f32 temps sit well under
    the 32 MiB scoped-VMEM limit on every TPU generation."""
    rows = buffer_budget_bytes // max(1, c * itemsize)
    rows = (rows // 8) * 8
    rows = max(8, min(512, rows))
    return rows if rows < n else n


def label_smoothing_loss(logits, target, *, num_classes, smoothing_coef=0.0,
                         tile_n=None):
    """logits: (N, C) float (f32 or bf16), target: (N,) int -> scalar f32 loss."""
    n, c = logits.shape
    assert c == num_classes
    target2d = target.astype(jnp.int32).reshape(n, 1)

    if tile_n is None:
        tile_n = _choose_tile_n(n, c, jnp.dtype(logits.dtype).itemsize)
    else:
        tile_n = min(tile_n, n)
        if tile_n < n:
            tile_n = max(8, (tile_n // 8) * 8)

    num_tiles = pl.cdiv(n, tile_n)

    kernel = functools.partial(_label_smoothing_kernel,
                               num_classes=num_classes,
                               smoothing_coef=smoothing_coef)

    # TODO(synk): for LLM-scale vocab (C ~128K+) add a second ("arbitrary") grid
    # axis over class tiles with an online log-sum-exp instead of full-C blocks.
    per_row = pl.pallas_call(
        kernel,
        out_shape=jax.ShapeDtypeStruct((n, 1), jnp.float32),
        grid_spec=pltpu.PrefetchScalarGridSpec(
            num_scalar_prefetch=0,
            grid=(num_tiles,),
            in_specs=[
                pl.BlockSpec((tile_n, c), lambda i: (i, 0)),
                pl.BlockSpec((tile_n, 1), lambda i: (i, 0)),
            ],
            out_specs=pl.BlockSpec((tile_n, 1), lambda i: (i, 0)),
        ),
        compiler_params=pltpu.CompilerParams(
            dimension_semantics=("parallel",),
            vmem_limit_bytes=32 * 1024 * 1024),
    )(logits, target2d)

    # Tiny JAX epilogue: mean over the *global* N.
    return jnp.sum(per_row) / jnp.float32(n)


def _reference(logits, target, num_classes, smoothing_coef):
    confidence = 1.0 - smoothing_coef
    logp = jax.nn.log_softmax(logits.astype(jnp.float32), axis=-1)
    true_dist = jnp.full_like(logp, smoothing_coef / (num_classes - 1))
    true_dist = true_dist.at[jnp.arange(logits.shape[0]), target].set(confidence)
    return jnp.mean(jnp.sum(-true_dist * logp, axis=-1))


if __name__ == "__main__":
    key = jax.random.PRNGKey(0)
    k1, k2, k3, k4 = jax.random.split(key, 4)
    smoothing = 0.1

    # Test 1: small single-tile case, f32.
    N, C = 8, 32
    logits = jax.random.normal(k1, (N, C), dtype=jnp.float32)
    target = jax.random.randint(k2, (N,), 0, C, dtype=jnp.int32)
    loss = jax.block_until_ready(
        label_smoothing_loss(logits, target, num_classes=C,
                             smoothing_coef=smoothing))
    ref = _reference(logits, target, C, smoothing)
    assert jnp.allclose(loss, ref, atol=1e-5, rtol=1e-5), (loss, ref)

    # Test 2: N not a multiple of the row tile (padded last tile) + bf16 input
    # kept in bf16 for the HBM->VMEM DMA.
    N2, C2 = 13, 128
    logits2 = jax.random.normal(k3, (N2, C2), dtype=jnp.float32).astype(jnp.bfloat16)
    target2 = jax.random.randint(k4, (N2,), 0, C2, dtype=jnp.int32)
    loss2 = jax.block_until_ready(
        label_smoothing_loss(logits2, target2, num_classes=C2,
                             smoothing_coef=smoothing, tile_n=8))
    ref2 = _reference(logits2, target2, C2, smoothing)
    assert jnp.allclose(loss2, ref2, atol=1e-4, rtol=1e-4), (loss2, ref2)

    print("KERNEL_OK")
</pallas_src>

<mosaic_0001>
module attributes {stable_mosaic.version = 11 : i64} {
  func.func @_label_smoothing_kernel(%arg0: i32, %arg1: memref<8x32xf32, #tpu.memory_space<vmem>>, %arg2: memref<8x1xi32, #tpu.memory_space<vmem>>, %arg3: memref<8x1xf32, #tpu.memory_space<vmem>>) attributes {dimension_semantics = [#tpu.dimension_semantics<parallel>], iteration_bounds = array<i64: 1>, scalar_prefetch = 0 : i64, scratch_operands = 0 : i64, tpu.core_type = #tpu.core_type<tc>, window_params = [{transform_indices = @transform_0, window_bounds = array<i64: 8, 32>}, {transform_indices = @transform_1, window_bounds = array<i64: 8, 1>}, {transform_indices = @transform_2, window_bounds = array<i64: 8, 1>}]} {
    %c0 = arith.constant 0 : index
    %c0_0 = arith.constant 0 : index
    %0 = vector.load %arg1[%c0, %c0_0] : memref<8x32xf32, #tpu.memory_space<vmem>>, vector<8x32xf32>
    %c0_1 = arith.constant 0 : index
    %c0_2 = arith.constant 0 : index
    %1 = vector.load %arg2[%c0_1, %c0_2] : memref<8x1xi32, #tpu.memory_space<vmem>>, vector<8x1xi32>
    %cst = arith.constant dense<0xFF800000> : vector<8xf32>
    %2 = vector.multi_reduction <maximumf>, %0, %cst [1] : vector<8x32xf32> to vector<8xf32>
    %3 = vector.shape_cast %2 : vector<8xf32> to vector<8x1xf32>
    %4 = vector.broadcast %3 : vector<8x1xf32> to vector<8x32xf32>
    %5 = arith.subf %0, %4 : vector<8x32xf32>
    %6 = math.exp %5 : vector<8x32xf32>
    %cst_3 = arith.constant dense<0.000000e+00> : vector<8xf32>
    %7 = vector.multi_reduction <add>, %6, %cst_3 [1] : vector<8x32xf32> to vector<8xf32>
    %8 = vector.shape_cast %7 : vector<8xf32> to vector<8x1xf32>
    %9 = math.log %8 : vector<8x1xf32>
    %cst_4 = arith.constant dense<0.000000e+00> : vector<8xf32>
    %10 = vector.multi_reduction <add>, %5, %cst_4 [1] : vector<8x32xf32> to vector<8xf32>
    %11 = vector.shape_cast %10 : vector<8xf32> to vector<8x1xf32>
    %12 = tpu.iota {dimensions = array<i32: 1>} : vector<8x32xi32>
    %13 = vector.broadcast %1 : vector<8x1xi32> to vector<8x32xi32>
    %14 = arith.cmpi eq, %12, %13 : vector<8x32xi32>
    %cst_5 = arith.constant 0.000000e+00 : f32
    %15 = vector.broadcast %cst_5 : f32 to vector<8x32xf32>
    %16 = arith.select %14, %5, %15 : vector<8x32xi1>, vector<8x32xf32>
    %cst_6 = arith.constant dense<0.000000e+00> : vector<8xf32>
    %17 = vector.multi_reduction <add>, %16, %cst_6 [1] : vector<8x32xf32> to vector<8xf32>
    %18 = vector.shape_cast %17 : vector<8xf32> to vector<8x1xf32>
    %cst_7 = arith.constant 3.200000e+01 : f32
    %19 = vector.broadcast %cst_7 : f32 to vector<8x1xf32>
    %20 = arith.mulf %19, %9 : vector<8x1xf32>
    %21 = arith.subf %11, %20 : vector<8x1xf32>
    %22 = arith.subf %18, %9 : vector<8x1xf32>
    %cst_8 = arith.constant 0.0032258064 : f32
    %23 = vector.broadcast %cst_8 : f32 to vector<8x1xf32>
    %24 = arith.mulf %23, %21 : vector<8x1xf32>
    %cst_9 = arith.constant 0.896774172 : f32
    %25 = vector.broadcast %cst_9 : f32 to vector<8x1xf32>
    %26 = arith.mulf %25, %22 : vector<8x1xf32>
    %27 = arith.addf %24, %26 : vector<8x1xf32>
    %cst_10 = arith.constant 0.000000e+00 : f32
    %28 = vector.broadcast %cst_10 : f32 to vector<8x1xf32>
    %29 = arith.subf %28, %27 : vector<8x1xf32>
    %c0_11 = arith.constant 0 : index
    %c0_12 = arith.constant 0 : index
    %30 = vector.load %arg3[%c0_11, %c0_12] : memref<8x1xf32, #tpu.memory_space<vmem>>, vector<8x1xf32>
    tpu.vector_store %arg3[%c0_11, %c0_12], %29 {strides = array<i32>} : memref<8x1xf32, #tpu.memory_space<vmem>>, vector<8x1xf32>,
    return
  }
  func.func @transform_0(%arg0: i32) -> (i32, i32) {
    %c0_i32 = arith.constant 0 : i32
    %c0_i32_0 = arith.constant 0 : i32
    return %arg0, %c0_i32 : i32, i32
  }
  func.func @transform_1(%arg0: i32) -> (i32, i32) {
    %c0_i32 = arith.constant 0 : i32
    %c0_i32_0 = arith.constant 0 : i32
    return %arg0, %c0_i32 : i32, i32
  }
  func.func @transform_2(%arg0: i32) -> (i32, i32) {
    %c0_i32 = arith.constant 0 : i32
    %c0_i32_0 = arith.constant 0 : i32
    return %arg0, %c0_i32 : i32, i32
  }
}

</mosaic_0001>

<llo_original>
// kernel: tpu_custom_call.1
$region0: #{tpu_custom_call.1}
  #allocation0 [shape = 'u32[]', space=smem, size = 0x4, offset = 0x4, fixed_abs, tag = 'smem constant byte address 0x4 - core index']
  #allocation1 [shape = 'u32[72,128]{1,0:T(1,128)}', space=vmem, size = 0x9000, scoped, tag = 'internal scratch']
  %s0 = inlined_call_operand.vmem [shape: f32[8,32], index: 0, kind: input, shape index: {}]
  %s1 = inlined_call_operand.vmem [shape: s32[8,1], index: 1, kind: input, shape index: {}]
  %s2 = inlined_call_operand.vmem [shape: f32[8,1], index: 2, kind: output, shape index: {}]
  %s3 = sld [smem:[#allocation0]]
  $region18: #{tpu_custom_call.1} parent=0
    _
  %s5 = ssub.s32 1, %s3
  %s6 = scalar_select 0, %s5, %s3
  // Predicated region
  $region2: #{tpu_custom_call.1} parent=0 // pred_check
    _
  $region3: #{tpu_custom_call.1} parent=0 // pred_check_branch
    %8 = sbr.rel (0) target = $region5
  $region4: #{tpu_custom_call.1} parent=0 // pred_region
    _
  $region5: #{tpu_custom_call.1} parent=0 // pred_fallthru
    _
  // Predicated region
  $region6: #{tpu_custom_call.1} parent=0 // pred_check
    _
  $region7: #{tpu_custom_call.1} parent=0 // pred_check_branch
    %10 = sbr.rel (0) target = $region9
  $region8: #{tpu_custom_call.1} parent=0 // pred_region
    _
  $region9: #{tpu_custom_call.1} parent=0 // pred_fallthru
    _
  %v11 = vld [vmem:[%s0] sm:$0xff]
  %v12 = vld [vmem:[%s1] sm:$0xff]
  %vm13 = vcmask 261120
  %v14 = vsel %vm13, %v11, -inf
  %15 = vmax.xlane.f32.xlu0 %v14
  %v16 = vpop.xlane.xlu0 %15
  %v17 = vsub.f32 %v11, %v16
  %v18 = vmul.f32 %v17, 1.442695
  %v19 = vpow.pop %v18
  %v20 = vsel %vm13, %v19, 0.0
  %21 = vadd.xlane.f32.xlu0 %v20
  %v22 = vpop.xlane.xlu0 %21
  %v23 = vlog2.pop %v22
  %v24 = vmul.f32 %v23, 0.6931472
  %v25 = vsel %vm13, %v17, 0.0
  %26 = vadd.xlane.f32.xlu0 %v25
  %v27 = vpop.xlane.xlu0 %26
  %v28 = vlaneseq
  %v29 = vand.u32 %v28, 127
  %30 = vset.pattern.permute.xlu0 0
  %31 = vperm.xlu0 %30, %v12
  %v32 = vpop.permute.xlu0 %31
  %vm33 = vcmp.eq.s32.totalorder %v29, %v32
  %v34 = vsel %vm33, %v17, 0.0
  %v35 = vsel %vm13, %v34, 0.0
  %36 = vadd.xlane.f32.xlu0 %v35
  %v37 = vpop.xlane.xlu0 %36
  %v38 = vmul.f32 %v24, 32.0
  %v39 = vsub.f32 %v27, %v38
  %v40 = vsub.f32 %v37, %v24
  %v41 = vmul.f32 %v39, 0.0032258064
  %v42 = vmul.f32 %v40, 0.8967742
  %v43 = vadd.f32 %v41, %v42
  %v44 = vsub.f32 0.0, %v43
  %vm45 = vcmask 7168
  %46 = vst.msk [vmem:[%s2] sm:$0xff] %vm45, %v44
  // Predicated region
  $region10: #{tpu_custom_call.1} parent=0 // pred_check
    _
  $region11: #{tpu_custom_call.1} parent=0 // pred_check_branch
    %48 = sbr.rel (0) target = $region13
  $region12: #{tpu_custom_call.1} parent=0 // pred_region
    _
  $region13: #{tpu_custom_call.1} parent=0 // pred_fallthru
    _
  // Predicated region
  $region14: #{tpu_custom_call.1} parent=0 // pred_check
    _
  $region15: #{tpu_custom_call.1} parent=0 // pred_check_branch
    %50 = sbr.rel (0) target = $region17
  $region16: #{tpu_custom_call.1} parent=0 // pred_region
    _
  $region17: #{tpu_custom_call.1} parent=0 // pred_fallthru
    _

</llo_original>
